<compile_context>
chip_gen: v7x
topology: tpu7x:2x2x1
jax: 0.10.0
libtpu: 0.0.40
codegen_flags: <defaults>
</compile_context>

<pallas_src>
import jax
import jax.numpy as jnp
from jax import lax
from jax.experimental import pallas as pl
from jax.experimental.pallas import tpu as pltpu


# Conservative per-step VMEM budget: leaves headroom under v7x's 64 MiB/TC and
# is well below v5e/v6e's 128 MiB.
_VMEM_BUDGET_BYTES = 48 * 1024 * 1024


def _mi_sa_kernel(seq_ref, bias_ref, w1_ref, w2_ref, out_ref):
    # seq_ref  : (Bt, S, E)  compute dtype (bf16 by default, f32 for parity)
    # bias_ref : (Bt, S, 1)  f32 additive mask bias (-1e9 on padded positions)
    # w1_ref   : (E, D)      compute dtype (grid-invariant, single-buffered)
    # w2_ref   : (D, K)      compute dtype (grid-invariant, single-buffered)
    # out_ref  : (Bt, K, E)  f32
    Bt, S, E = seq_ref.shape
    K = w2_ref.shape[1]

    seq = seq_ref[...]                                   # (Bt, S, E)
    seq2d = seq.reshape(Bt * S, E)                       # free leading-dim merge

    # H = tanh(seq @ W1): MXU matmul with a real M dim (Bt*S), f32 accumulation,
    # tanh on the f32 accumulator (EUP).
    # TODO(synk): on v6e/v7x the tanh can run on the bf16 copy for ~2x EUP rate
    # (v5e's EUP has no bf16 path), at a small accuracy cost.
    h32 = jnp.tanh(jnp.dot(seq2d, w1_ref[...],
                           preferred_element_type=jnp.float32))     # (Bt*S, D) f32
    h = h32.astype(seq.dtype)

    # logits = H @ W2 (small N=K, padded on the MXU -- cheap in compute dtype;
    # a VPU multiply + lane-reduce alternative exists if MXU becomes binding).
    logits = jnp.dot(h, w2_ref[...],
                     preferred_element_type=jnp.float32)            # (Bt*S, K) f32
    # Layout-matching additive mask: bias has S on sublanes like logits -> VPU add.
    logits = logits.reshape(Bt, S, K) + bias_ref[...]               # (Bt, S, K)

    # Softmax over the sequence axis (axis=1), entirely in f32.
    m = jnp.max(logits, axis=1, keepdims=True)
    e = jnp.exp(logits - m)
    denom = jnp.sum(e, axis=1, keepdims=True)
    # Exact reciprocal for module parity (approx=True is a cheap prod option).
    a = e * pl.reciprocal(denom, approx=False)                      # (Bt, S, K) f32

    # multi_interest_emb = A^T @ seq per batch element. K is tiny, so an
    # unrolled VPU weighted sum over S avoids Bt tiny MXU matmuls.
    seq_f32 = seq.astype(jnp.float32)
    for k in range(K):
        pooled = jnp.sum(a[:, :, k:k + 1] * seq_f32,
                         axis=1, keepdims=True)                     # (Bt, 1, E)
        out_ref[:, k:k + 1, :] = pooled.astype(out_ref.dtype)


def _divisors_desc(n):
    return [d for d in range(n, 0, -1) if n % d == 0]


def _vmem_bytes_per_step(bt, s, e, d, k, cbytes):
    seq_blk = 2 * bt * s * e * cbytes            # double-buffered seq input
    bias_blk = 2 * bt * s * 4                    # double-buffered f32 bias input
    weights = (e * d + d * k) * cbytes           # Buffered(1): single resident copy
    out_blk = 2 * bt * k * e * 4                 # double-buffered f32 output
    interm = bt * s * d * (4 + cbytes)           # f32 tanh accumulator + cast copy
    interm += 4 * bt * s * k * 4                 # logits / max / exp / softmax temps
    interm += bt * s * e * 4                     # f32 seq copy for the pooling sums
    return int(1.4 * (seq_blk + bias_blk + weights + out_blk + interm))


def _choose_batch_block(b, block_b, s, e, d, k, cbytes, min_grid_steps=2):
    """Largest divisor of b (no jnp.pad) that fits the VMEM budget; prefer a
    grid of >= 2 steps so the 'parallel' batch axis shards across v7x's 2 TCs."""
    bt = 1
    for cand in _divisors_desc(b):
        if cand <= max(1, block_b) and \
           _vmem_bytes_per_step(cand, s, e, d, k, cbytes) <= _VMEM_BUDGET_BYTES:
            bt = cand
            break
    if b >= min_grid_steps and b // bt < min_grid_steps:
        for cand in _divisors_desc(b):
            if b // cand >= min_grid_steps and \
               _vmem_bytes_per_step(cand, s, e, d, k, cbytes) <= _VMEM_BUDGET_BYTES:
                bt = cand
                break
    return bt


def multi_interest_sa(seq_emb, mask, w1, w2, *, block_b=64,
                      compute_dtype=jnp.bfloat16):
    """seq_emb: (B, S, E), mask: (B, S, 1) or None, w1: (E, D), w2: (D, K).

    compute_dtype controls the MXU matmul-input precision (bf16 default for
    perf; jnp.float32 for exact parity with the PyTorch module). Accumulation,
    masking, softmax and pooling are always f32.
    """
    B, S, E = seq_emb.shape
    D = w1.shape[1]
    K = w2.shape[1]

    # Additive mask bias in f32 (layout-matches the (Bt, S, K) logits).
    if mask is None:
        bias = jnp.zeros((B, S, 1), dtype=jnp.float32)
    else:
        bias = (-1000000000.0) * (1.0 - mask.reshape(B, S, 1).astype(jnp.float32))

    # Matmul inputs in compute dtype (halves HBM traffic for the dominant seq
    # stream and runs the MXU at full rate when bf16).
    seq_c = seq_emb.astype(compute_dtype)
    w1_c = w1.astype(compute_dtype)
    w2_c = w2.astype(compute_dtype)
    cbytes = jnp.dtype(compute_dtype).itemsize

    Bt = _choose_batch_block(B, block_b, S, E, D, K, cbytes)
    grid = (B // Bt,)

    cost = pl.CostEstimate(
        flops=int(2 * B * S * E * D + 2 * B * S * D * K + 2 * B * S * K * E),
        transcendentals=int(B * S * D + B * S * K),
        bytes_accessed=int(B * S * E * cbytes + B * S * 4
                           + (E * D + D * K) * cbytes + B * K * E * 4),
    )

    out = pl.pallas_call(
        _mi_sa_kernel,
        out_shape=jax.ShapeDtypeStruct((B, K, E), jnp.float32),
        grid=grid,
        in_specs=[
            pl.BlockSpec((Bt, S, E), lambda b: (b, 0, 0)),
            pl.BlockSpec((Bt, S, 1), lambda b: (b, 0, 0)),
            # Grid-invariant weights: constant index_map + single buffer
            # (reclaims the redundant second weight buffer's VMEM).
            pl.BlockSpec((E, D), lambda b: (0, 0), pipeline_mode=pl.Buffered(1)),
            pl.BlockSpec((D, K), lambda b: (0, 0), pipeline_mode=pl.Buffered(1)),
        ],
        out_specs=pl.BlockSpec((Bt, K, E), lambda b: (b, 0, 0)),
        compiler_params=pltpu.CompilerParams(
            dimension_semantics=("parallel",),
            vmem_limit_bytes=_VMEM_BUDGET_BYTES),
        cost_estimate=cost,
    )(seq_c, bias, w1_c, w2_c)

    return out.astype(seq_emb.dtype)


def _reference(seq_emb, mask, w1, w2):
    """Exact f32 reference matching the PyTorch module."""
    hp = lax.Precision.HIGHEST
    h = jnp.tanh(jnp.einsum('bse,ed->bsd', seq_emb, w1, precision=hp))
    a = jnp.einsum('bsd,dk->bsk', h, w2, precision=hp)
    if mask is not None:
        a = a + (-1000000000.0) * (1.0 - mask.astype(jnp.float32))
    a = jax.nn.softmax(a, axis=1)
    return jnp.einsum('bsk,bse->bke', a, seq_emb, precision=hp)


def _reference_bf16(seq_emb, mask, w1, w2):
    """Reference that mirrors the kernel's bf16-matmul-input / f32-accumulate path."""
    seq_b = seq_emb.astype(jnp.bfloat16)
    h = jnp.tanh(jnp.einsum('bse,ed->bsd', seq_b, w1.astype(jnp.bfloat16),
                            preferred_element_type=jnp.float32))
    logits = jnp.einsum('bsd,dk->bsk', h.astype(jnp.bfloat16),
                        w2.astype(jnp.bfloat16),
                        preferred_element_type=jnp.float32)
    if mask is not None:
        logits = logits + (-1000000000.0) * (1.0 - mask.astype(jnp.float32))
    a = jax.nn.softmax(logits, axis=1)
    return jnp.einsum('bsk,bse->bke', a, seq_b.astype(jnp.float32),
                      precision=lax.Precision.HIGHEST)


if __name__ == "__main__":
    B, S, E, K = 2, 8, 32, 4
    D = E * 4  # module default: d = embedding_dim * 4

    key = jax.random.PRNGKey(0)
    k_seq, k_w1, k_w2, k_w3, _ = jax.random.split(key, 5)

    seq_emb = jax.random.normal(k_seq, (B, S, E), dtype=jnp.float32)
    # torch.rand-style uniform [0, 1) parameter init.
    W1 = jax.random.uniform(k_w1, (E, D), dtype=jnp.float32)
    W2 = jax.random.uniform(k_w2, (D, K), dtype=jnp.float32)
    W3 = jax.random.uniform(k_w3, (E, E), dtype=jnp.float32)  # unused in forward

    # mask: 1 for valid positions, 0 for padded (last 2 positions of batch 1).
    mask = jnp.ones((B, S, 1), dtype=jnp.float32)
    mask = mask.at[1, S - 2:, :].set(0.0)

    # 1) Exact-parity path (f32 matmul inputs) vs. the f32 reference.
    out_f32 = jax.block_until_ready(
        multi_interest_sa(seq_emb, mask, W1, W2, compute_dtype=jnp.float32))
    ref_f32 = _reference(seq_emb, mask, W1, W2)
    assert out_f32.shape == (B, K, E)
    assert jnp.allclose(out_f32, ref_f32, atol=5e-3, rtol=5e-3), float(
        jnp.max(jnp.abs(out_f32 - ref_f32)))

    # 2) Default perf path (bf16 matmul inputs, f32 accumulate/mask/softmax)
    #    vs. a precision-matched reference.
    out_bf16 = jax.block_until_ready(multi_interest_sa(seq_emb, mask, W1, W2))
    ref_bf16 = _reference_bf16(seq_emb, mask, W1, W2)
    assert out_bf16.shape == (B, K, E)
    assert jnp.allclose(out_bf16, ref_bf16, atol=2e-2, rtol=2e-2), float(
        jnp.max(jnp.abs(out_bf16 - ref_bf16)))

    print("KERNEL_OK")
</pallas_src>

<mosaic_0001>
module attributes {stable_mosaic.version = 11 : i64} {
  func.func @_mi_sa_kernel(%arg0: i32, %arg1: memref<1x8x32xf32, #tpu.memory_space<vmem>>, %arg2: memref<1x8x1xf32, #tpu.memory_space<vmem>>, %arg3: memref<32x128xf32, #tpu.memory_space<vmem>>, %arg4: memref<128x4xf32, #tpu.memory_space<vmem>>, %arg5: memref<1x4x32xf32, #tpu.memory_space<vmem>>) attributes {dimension_semantics = [#tpu.dimension_semantics<parallel>], iteration_bounds = array<i64: 2>, scalar_prefetch = 0 : i64, scratch_operands = 0 : i64, tpu.core_type = #tpu.core_type<tc>, window_params = [{transform_indices = @transform_0, window_bounds = array<i64: 1, 8, 32>}, {transform_indices = @transform_1, window_bounds = array<i64: 1, 8, 1>}, {pipeline_mode = #tpu.pipeline_mode<synchronous>, transform_indices = @transform_2, window_bounds = array<i64: 32, 128>}, {pipeline_mode = #tpu.pipeline_mode<synchronous>, transform_indices = @transform_3, window_bounds = array<i64: 128, 4>}, {transform_indices = @transform_4, window_bounds = array<i64: 1, 4, 32>}]} {
    %c0 = arith.constant 0 : index
    %c0_0 = arith.constant 0 : index
    %c0_1 = arith.constant 0 : index
    %0 = vector.load %arg1[%c0, %c0_0, %c0_1] : memref<1x8x32xf32, #tpu.memory_space<vmem>>, vector<1x8x32xf32>
    %1 = vector.shape_cast %0 : vector<1x8x32xf32> to vector<8x32xf32>
    %c0_2 = arith.constant 0 : index
    %c0_3 = arith.constant 0 : index
    %2 = vector.load %arg3[%c0_2, %c0_3] : memref<32x128xf32, #tpu.memory_space<vmem>>, vector<32x128xf32>
    %cst = arith.constant dense<0.000000e+00> : vector<8x128xf32>
    %3 = tpu.matmul %1, %2, %cst {dimension_numbers = #tpu.dot_dimension_numbers<[1], [0], [0], [1], [0, 0, 1, 1], [], []>} : vector<8x32xf32>, vector<32x128xf32>, vector<8x128xf32> -> vector<8x128xf32>
    %4 = math.tanh %3 : vector<8x128xf32>
    %c0_4 = arith.constant 0 : index
    %c0_5 = arith.constant 0 : index
    %5 = vector.load %arg4[%c0_4, %c0_5] : memref<128x4xf32, #tpu.memory_space<vmem>>, vector<128x4xf32>
    %cst_6 = arith.constant dense<0.000000e+00> : vector<8x4xf32>
    %6 = tpu.matmul %4, %5, %cst_6 {dimension_numbers = #tpu.dot_dimension_numbers<[1], [0], [0], [1], [0, 0, 1, 1], [], []>} : vector<8x128xf32>, vector<128x4xf32>, vector<8x4xf32> -> vector<8x4xf32>
    %7 = vector.shape_cast %6 : vector<8x4xf32> to vector<1x8x4xf32>
    %c0_7 = arith.constant 0 : index
    %c0_8 = arith.constant 0 : index
    %c0_9 = arith.constant 0 : index
    %8 = vector.load %arg2[%c0_7, %c0_8, %c0_9] : memref<1x8x1xf32, #tpu.memory_space<vmem>>, vector<1x8x1xf32>
    %9 = vector.broadcast %8 : vector<1x8x1xf32> to vector<1x8x4xf32>
    %10 = arith.addf %7, %9 : vector<1x8x4xf32>
    %cst_10 = arith.constant dense<0xFF800000> : vector<1x4xf32>
    %11 = vector.multi_reduction <maximumf>, %10, %cst_10 [1] : vector<1x8x4xf32> to vector<1x4xf32>
    %12 = vector.shape_cast %11 : vector<1x4xf32> to vector<1x1x4xf32>
    %13 = vector.broadcast %12 : vector<1x1x4xf32> to vector<1x8x4xf32>
    %14 = arith.subf %10, %13 : vector<1x8x4xf32>
    %15 = math.exp %14 : vector<1x8x4xf32>
    %cst_11 = arith.constant dense<0.000000e+00> : vector<1x4xf32>
    %16 = vector.multi_reduction <add>, %15, %cst_11 [1] : vector<1x8x4xf32> to vector<1x4xf32>
    %17 = vector.shape_cast %16 : vector<1x4xf32> to vector<1x1x4xf32>
    %18 = tpu.reciprocal %17 : vector<1x1x4xf32> -> vector<1x1x4xf32>
    %19 = vector.broadcast %18 : vector<1x1x4xf32> to vector<1x8x4xf32>
    %20 = arith.mulf %15, %19 : vector<1x8x4xf32>
    %21 = vector.extract_strided_slice %20 {offsets = [0, 0, 0], sizes = [1, 8, 1], strides = [1, 1, 1]} : vector<1x8x4xf32> to vector<1x8x1xf32>
    %22 = vector.broadcast %21 : vector<1x8x1xf32> to vector<1x8x32xf32>
    %23 = arith.mulf %22, %0 : vector<1x8x32xf32>
    %cst_12 = arith.constant dense<0.000000e+00> : vector<1x32xf32>
    %24 = vector.multi_reduction <add>, %23, %cst_12 [1] : vector<1x8x32xf32> to vector<1x32xf32>
    %25 = vector.shape_cast %24 : vector<1x32xf32> to vector<1x1x32xf32>
    %c0_13 = arith.constant 0 : index
    %c0_14 = arith.constant 0 : index
    %c0_15 = arith.constant 0 : index
    %26 = vector.load %arg5[%c0_13, %c0_14, %c0_15] : memref<1x4x32xf32, #tpu.memory_space<vmem>>, vector<1x1x32xf32>
    tpu.vector_store %arg5[%c0_13, %c0_14, %c0_15], %25 {strides = array<i32>} : memref<1x4x32xf32, #tpu.memory_space<vmem>>, vector<1x1x32xf32>,
    %27 = vector.extract_strided_slice %20 {offsets = [0, 0, 1], sizes = [1, 8, 1], strides = [1, 1, 1]} : vector<1x8x4xf32> to vector<1x8x1xf32>
    %28 = vector.broadcast %27 : vector<1x8x1xf32> to vector<1x8x32xf32>
    %29 = arith.mulf %28, %0 : vector<1x8x32xf32>
    %cst_16 = arith.constant dense<0.000000e+00> : vector<1x32xf32>
    %30 = vector.multi_reduction <add>, %29, %cst_16 [1] : vector<1x8x32xf32> to vector<1x32xf32>
    %31 = vector.shape_cast %30 : vector<1x32xf32> to vector<1x1x32xf32>
    %c0_17 = arith.constant 0 : index
    %c1 = arith.constant 1 : index
    %c0_18 = arith.constant 0 : index
    %32 = vector.load %arg5[%c0_17, %c1, %c0_18] : memref<1x4x32xf32, #tpu.memory_space<vmem>>, vector<1x1x32xf32>
    tpu.vector_store %arg5[%c0_17, %c1, %c0_18], %31 {strides = array<i32>} : memref<1x4x32xf32, #tpu.memory_space<vmem>>, vector<1x1x32xf32>,
    %33 = vector.extract_strided_slice %20 {offsets = [0, 0, 2], sizes = [1, 8, 1], strides = [1, 1, 1]} : vector<1x8x4xf32> to vector<1x8x1xf32>
    %34 = vector.broadcast %33 : vector<1x8x1xf32> to vector<1x8x32xf32>
    %35 = arith.mulf %34, %0 : vector<1x8x32xf32>
    %cst_19 = arith.constant dense<0.000000e+00> : vector<1x32xf32>
    %36 = vector.multi_reduction <add>, %35, %cst_19 [1] : vector<1x8x32xf32> to vector<1x32xf32>
    %37 = vector.shape_cast %36 : vector<1x32xf32> to vector<1x1x32xf32>
    %c0_20 = arith.constant 0 : index
    %c2 = arith.constant 2 : index
    %c0_21 = arith.constant 0 : index
    %38 = vector.load %arg5[%c0_20, %c2, %c0_21] : memref<1x4x32xf32, #tpu.memory_space<vmem>>, vector<1x1x32xf32>
    tpu.vector_store %arg5[%c0_20, %c2, %c0_21], %37 {strides = array<i32>} : memref<1x4x32xf32, #tpu.memory_space<vmem>>, vector<1x1x32xf32>,
    %39 = vector.extract_strided_slice %20 {offsets = [0, 0, 3], sizes = [1, 8, 1], strides = [1, 1, 1]} : vector<1x8x4xf32> to vector<1x8x1xf32>
    %40 = vector.broadcast %39 : vector<1x8x1xf32> to vector<1x8x32xf32>
    %41 = arith.mulf %40, %0 : vector<1x8x32xf32>
    %cst_22 = arith.constant dense<0.000000e+00> : vector<1x32xf32>
    %42 = vector.multi_reduction <add>, %41, %cst_22 [1] : vector<1x8x32xf32> to vector<1x32xf32>
    %43 = vector.shape_cast %42 : vector<1x32xf32> to vector<1x1x32xf32>
    %c0_23 = arith.constant 0 : index
    %c3 = arith.constant 3 : index
    %c0_24 = arith.constant 0 : index
    %44 = vector.load %arg5[%c0_23, %c3, %c0_24] : memref<1x4x32xf32, #tpu.memory_space<vmem>>, vector<1x1x32xf32>
    tpu.vector_store %arg5[%c0_23, %c3, %c0_24], %43 {strides = array<i32>} : memref<1x4x32xf32, #tpu.memory_space<vmem>>, vector<1x1x32xf32>,
    return
  }
  func.func @transform_0(%arg0: i32) -> (i32, i32, i32) {
    %c0_i32 = arith.constant 0 : i32
    %c0_i32_0 = arith.constant 0 : i32
    %c0_i32_1 = arith.constant 0 : i32
    return %arg0, %c0_i32, %c0_i32_0 : i32, i32, i32
  }
  func.func @transform_1(%arg0: i32) -> (i32, i32, i32) {
    %c0_i32 = arith.constant 0 : i32
    %c0_i32_0 = arith.constant 0 : i32
    %c0_i32_1 = arith.constant 0 : i32
    return %arg0, %c0_i32, %c0_i32_0 : i32, i32, i32
  }
  func.func @transform_2(%arg0: i32) -> (i32, i32) {
    %c0_i32 = arith.constant 0 : i32
    %c0_i32_0 = arith.constant 0 : i32
    %c0_i32_1 = arith.constant 0 : i32
    return %c0_i32, %c0_i32_0 : i32, i32
  }
  func.func @transform_3(%arg0: i32) -> (i32, i32) {
    %c0_i32 = arith.constant 0 : i32
    %c0_i32_0 = arith.constant 0 : i32
    %c0_i32_1 = arith.constant 0 : i32
    return %c0_i32, %c0_i32_0 : i32, i32
  }
  func.func @transform_4(%arg0: i32) -> (i32, i32, i32) {
    %c0_i32 = arith.constant 0 : i32
    %c0_i32_0 = arith.constant 0 : i32
    %c0_i32_1 = arith.constant 0 : i32
    return %arg0, %c0_i32, %c0_i32_0 : i32, i32, i32
  }
}

</mosaic_0001>

<llo_original>
// kernel: tpu_custom_call.1
$region0: #{tpu_custom_call.1}
  #allocation0 [shape = 'u32[]', space=smem, size = 0x4, offset = 0x4, fixed_abs, tag = 'smem constant byte address 0x4 - core index']
  #allocation1 [shape = 'u32[144,128]{1,0:T(1,128)}', space=vmem, size = 0x12000, scoped, tag = 'internal scratch']
  %s0 = inlined_call_operand.vmem [shape: f32[2,8,32], index: 0, kind: input, shape index: {}]
  %s1 = inlined_call_operand.vmem [shape: f32[2,8,1], index: 1, kind: input, shape index: {}]
  %s2 = inlined_call_operand.vmem [shape: f32[32,128], index: 2, kind: input, shape index: {}]
  %s3 = inlined_call_operand.vmem [shape: f32[128,4], index: 3, kind: input, shape index: {}]
  %s4 = inlined_call_operand.hbm [shape: f32[2,4,32], index: 4, kind: output, shape index: {}]
  %s5 = sld [smem:[#allocation0]]
  $region49: #{tpu_custom_call.1} parent=0
    _
  %s7 = ssub.s32 1, %s5
  %s8 = scalar_select 0, %s7, %s5
  $region1: #{tpu_custom_call.1} parent=0
    #allocation2 [shape = 'u8[4096]{0}', space=vmem, size = 0x1000, scoped, tag = 'output window, operand 0']
    #allocation3 [shape = 's32[2]{0}', space=sflag, size = 0x8, scoped, tag = 'scoped memory for tpu_custom_call.1']
    %9 = vsyncpa [#allocation3], 0
    %s10 = scalar_lea.sflag [#allocation3], 1
    %11 = vsyncpa %s10, 0
    loop: start=0, step=1, limit=4
    $region2: #{tpu_custom_call.1} parent=1 // loop_pre_header
      _
    $region3: #{tpu_custom_call.1} parent=1 // loop_header
      %s13 = sphi 0, %s17
      %p14 = scmp.ge.s32.totalorder %s13, 4
      %s23 = sphi 0, %s25
      %s26 = sphi 0, %s23
      %s27 = sphi 0, %s26
      %s43 = sphi 0, %s27
      %s49 = sphi 0, %s51
      %s52 = sphi 0, %s49
      %s53 = sphi 0, %s52
      %s69 = sphi 0, %s53
      %s73 = sphi 0, %s73
      %s75 = sphi 0, %s73
      %s76 = sphi 0, %s75
      %s90 = sphi 0, %s76
      %s94 = sphi 0, %s94
      %s96 = sphi 0, %s94
      %s97 = sphi 0, %s96
      %s111 = sphi 0, %s97
      %s117 = sphi 0, %s119
      %s120 = sphi 0, %s117
      %s121 = sphi 0, %s120
      %s137 = sphi 0, %s121
    $region4: #{tpu_custom_call.1} parent=1 // loop_header_branch
      %16 = sbr.rel (%p14) target = $region8
    $region5: #{tpu_custom_call.1} parent=1 // loop_body
      %s18 = ssub.s32 %s13, 1
      %s19 = ssub.s32 %s13, 2
      %s20 = sadd.s32 %s13, 1
      %s21 = ssub.s32 %s13, %s20
      %p22 = scmp.eq.s32.totalorder %s21, 0
      %s24 = sadd.s32 %s23, 1
      %s25 = scalar_select %p22, %s23, %s24
      %p28 = pneg %p22
      %p29 = scmp.eq.s32.totalorder %s13, 1
      %p30 = por %p28, %p29
      %p31 = scmp.ne.s32.totalorder %s23, %s26
      %p32 = scmp.eq.s32.totalorder %s13, 0
      %p33 = por %p31, %p32
      %p34 = scmp.ne.s32.totalorder %s23, %s26
      %p35 = scmp.eq.s32.totalorder %s18, 1
      %p36 = por %p34, %p35
      %p37 = scmp.ne.s32.totalorder %s26, %s27
      %p38 = scmp.eq.s32.totalorder %s18, 0
      %p39 = por %p37, %p38
      %p40 = scmp.ne.s32.totalorder %s26, %s27
      %p41 = scmp.eq.s32.totalorder %s19, 1
      %p42 = por %p40, %p41
      %p44 = scmp.ne.s32.totalorder %s27, %s43
      %p45 = scmp.eq.s32.totalorder %s19, 0
      %p46 = por %p44, %p45
      %s47 = ssub.s32 %s13, %s20
      %p48 = scmp.eq.s32.totalorder %s47, 0
      %s50 = sadd.s32 %s49, 1
      %s51 = scalar_select %p48, %s49, %s50
      %p54 = pneg %p48
      %p55 = scmp.eq.s32.totalorder %s13, 1
      %p56 = por %p54, %p55
      %p57 = scmp.ne.s32.totalorder %s49, %s52
      %p58 = scmp.eq.s32.totalorder %s13, 0
      %p59 = por %p57, %p58
      %p60 = scmp.ne.s32.totalorder %s49, %s52
      %p61 = scmp.eq.s32.totalorder %s18, 1
      %p62 = por %p60, %p61
      %p63 = scmp.ne.s32.totalorder %s52, %s53
      %p64 = scmp.eq.s32.totalorder %s18, 0
      %p65 = por %p63, %p64
      %p66 = scmp.ne.s32.totalorder %s52, %s53
      %p67 = scmp.eq.s32.totalorder %s19, 1
      %p68 = por %p66, %p67
      %p70 = scmp.ne.s32.totalorder %s53, %s69
      %p71 = scmp.eq.s32.totalorder %s19, 0
      %p72 = por %p70, %p71
      %s74 = sadd.s32 %s73, 1
      %p77 = scmp.eq.s32.totalorder %s13, 1
      %p78 = scmp.ne.s32.totalorder %s73, %s75
      %p79 = scmp.eq.s32.totalorder %s13, 0
      %p80 = por %p78, %p79
      %p81 = scmp.ne.s32.totalorder %s73, %s75
      %p82 = scmp.eq.s32.totalorder %s18, 1
      %p83 = por %p81, %p82
      %p84 = scmp.ne.s32.totalorder %s75, %s76
      %p85 = scmp.eq.s32.totalorder %s18, 0
      %p86 = por %p84, %p85
      %p87 = scmp.ne.s32.totalorder %s75, %s76
      %p88 = scmp.eq.s32.totalorder %s19, 1
      %p89 = por %p87, %p88
      %p91 = scmp.ne.s32.totalorder %s76, %s90
      %p92 = scmp.eq.s32.totalorder %s19, 0
      %p93 = por %p91, %p92
      %s95 = sadd.s32 %s94, 1
      %p98 = scmp.eq.s32.totalorder %s13, 1
      %p99 = scmp.ne.s32.totalorder %s94, %s96
      %p100 = scmp.eq.s32.totalorder %s13, 0
      %p101 = por %p99, %p100
      %p102 = scmp.ne.s32.totalorder %s94, %s96
      %p103 = scmp.eq.s32.totalorder %s18, 1
      %p104 = por %p102, %p103
      %p105 = scmp.ne.s32.totalorder %s96, %s97
      %p106 = scmp.eq.s32.totalorder %s18, 0
      %p107 = por %p105, %p106
      %p108 = scmp.ne.s32.totalorder %s96, %s97
      %p109 = scmp.eq.s32.totalorder %s19, 1
      %p110 = por %p108, %p109
      %p112 = scmp.ne.s32.totalorder %s97, %s111
      %p113 = scmp.eq.s32.totalorder %s19, 0
      %p114 = por %p112, %p113
      %s115 = ssub.s32 %s13, %s20
      %p116 = scmp.eq.s32.totalorder %s115, 0
      %s118 = sadd.s32 %s117, 1
      %s119 = scalar_select %p116, %s117, %s118
      %p122 = pneg %p116
      %p123 = scmp.eq.s32.totalorder %s13, 1
      %p124 = por %p122, %p123
      %p125 = scmp.ne.s32.totalorder %s117, %s120
      %p126 = scmp.eq.s32.totalorder %s13, 0
      %p127 = por %p125, %p126
      %p128 = scmp.ne.s32.totalorder %s117, %s120
      %p129 = scmp.eq.s32.totalorder %s18, 1
      %p130 = por %p128, %p129
      %p131 = scmp.ne.s32.totalorder %s120, %s121
      %p132 = scmp.eq.s32.totalorder %s18, 0
      %p133 = por %p131, %p132
      %p134 = scmp.ne.s32.totalorder %s120, %s121
      %p135 = scmp.eq.s32.totalorder %s19, 1
      %p136 = por %p134, %p135
      %p138 = scmp.ne.s32.totalorder %s121, %s137
      %p139 = scmp.eq.s32.totalorder %s19, 0
      %p140 = por %p138, %p139
      %p141 = scmp.le.s32.totalorder 1, %s13
      %p142 = scmp.lt.s32.totalorder %s13, 3
      %p143 = pnand %p141, %p142
      %p144 = pneg %p143
      // Predicated region
      $region9: #{tpu_custom_call.1} parent=5 // pred_check
        _
      $region10: #{tpu_custom_call.1} parent=5 // pred_check_branch
        %146 = sbr.rel (%p143) target = $region12
      $region11: #{tpu_custom_call.1} parent=5 // pred_region
        %s147 = ssub.s32 %s13, 1
        // Predicated region
        $region13: #{tpu_custom_call.1} parent=11 // pred_check
          %p148 = pneg %p86
        $region14: #{tpu_custom_call.1} parent=11 // pred_check_branch
          %150 = sbr.rel (%p148) target = $region16
        $region15: #{tpu_custom_call.1} parent=11 // pred_region
          _
        $region16: #{tpu_custom_call.1} parent=11 // pred_fallthru
          _
        // Predicated region
        $region17: #{tpu_custom_call.1} parent=11 // pred_check
          %p151 = pneg %p107
        $region18: #{tpu_custom_call.1} parent=11 // pred_check_branch
          %153 = sbr.rel (%p151) target = $region20
        $region19: #{tpu_custom_call.1} parent=11 // pred_region
          _
        $region20: #{tpu_custom_call.1} parent=11 // pred_fallthru
          _
      $region12: #{tpu_custom_call.1} parent=5 // pred_fallthru
        _
      %p154 = scmp.lt.s32.totalorder %s13, 2
      // Predicated region
      $region21: #{tpu_custom_call.1} parent=5 // pred_check
        %p155 = pneg %p154
      $region22: #{tpu_custom_call.1} parent=5 // pred_check_branch
        %157 = sbr.rel (%p155) target = $region24
      $region23: #{tpu_custom_call.1} parent=5 // pred_region
        // Predicated region
        $region25: #{tpu_custom_call.1} parent=23 // pred_check
          %p158 = pneg %p33
        $region26: #{tpu_custom_call.1} parent=23 // pred_check_branch
          %160 = sbr.rel (%p158) target = $region28
        $region27: #{tpu_custom_call.1} parent=23 // pred_region
          %p161 = scmp.lt.s32.totalorder %s13, 1
          %s162 = scalar_select %p161, %s13, 1
          %s163 = smul.addr %s162, 8
          %s164 = scalar_lea.vmem %s0, %s163
        $region28: #{tpu_custom_call.1} parent=23 // pred_fallthru
          _
        // Predicated region
        $region29: #{tpu_custom_call.1} parent=23 // pred_check
          %p165 = pneg %p59
        $region30: #{tpu_custom_call.1} parent=23 // pred_check_branch
          %167 = sbr.rel (%p165) target = $region32
        $region31: #{tpu_custom_call.1} parent=23 // pred_region
          %p168 = scmp.lt.s32.totalorder %s13, 1
          %s169 = scalar_select %p168, %s13, 1
          %s170 = smul.addr %s169, 8
          %s171 = scalar_lea.vmem %s1, %s170
        $region32: #{tpu_custom_call.1} parent=23 // pred_fallthru
          _
      $region24: #{tpu_custom_call.1} parent=5 // pred_fallthru
        _
      %p172 = scmp.le.s32.totalorder 1, %s13
      %p173 = scmp.lt.s32.totalorder %s13, 3
      %p174 = pnand %p172, %p173
      %p175 = pneg %p174
      // Predicated region
      $region33: #{tpu_custom_call.1} parent=5 // pred_check
        _
      $region34: #{tpu_custom_call.1} parent=5 // pred_check_branch
        %177 = sbr.rel (%p174) target = $region36
      $region35: #{tpu_custom_call.1} parent=5 // pred_region
        %s178 = ssub.s32 %s13, 1
        %p179 = scmp.lt.s32.totalorder %s18, 1
        %s180 = scalar_select %p179, %s18, 1
        %s181 = smul.addr %s180, 8
        %s182 = scalar_lea.vmem %s0, %s181
        %p183 = pneg %p39
        %p184 = pneg %p36
        %p185 = scmp.lt.s32.totalorder %s18, 1
        %s186 = scalar_select %p185, %s18, 1
        %s187 = smul.addr %s186, 8
        %s188 = scalar_lea.vmem %s1, %s187
        %p189 = pneg %p65
        %p190 = pneg %p62
        %p191 = pneg %p86
        %p192 = pneg %p83
        %p193 = pneg %p107
        %p194 = pneg %p104
        %p195 = pneg %p133
        %p196 = pneg %p130
        %s197 = sand.u32 %s120, 1
        %s198 = scalar_lea.sflag [#allocation3], %s197
        %s199 = sand.u32 %s120, 1
        %s200 = smul.addr %s199, 4
        %s201 = scalar_lea.vmem [#allocation2], %s200
        %p202 = scmp.lt.s32.totalorder %s18, 1
        %s203 = scalar_select %p202, %s18, 1
        %s204 = smul.addr %s203, 8
        %s205 = scalar_lea.vmem %s0, %s204
        %p206 = scmp.lt.s32.totalorder %s18, 1
        %s207 = scalar_select %p206, %s18, 1
        %s208 = smul.addr %s207, 8
        %s209 = scalar_lea.vmem %s1, %s208
        %v210 = vld [vmem:[%s205] sm:$0xff]
        %v211 = vld [vmem:[%s2] sm:$0xff]
        %v212 = vld [vmem:[%s2 + $0x8] sm:$0xff]
        %v213 = vld [vmem:[%s2 + $0x10] sm:$0xff]
        %v214 = vld [vmem:[%s2 + $0x18] sm:$0xff]
        %vm215 = vcmask 261120
        %v217 = vsel %vm215, %v210, 0
        %219 = vmatprep.subr.mxu0 0.0
        %220 = vmatpush1.msra.mxu0 %v211
        %221 = vmatprep.subr.mxu0 0.0
        %222 = vmatpush1.msra.mxu0 %v212
        %223 = vmatprep.subr.mxu0 0.0
        %224 = vmatpush1.msra.mxu0 %v213
        %225 = vmatprep.subr.mxu0 0.0
        %226 = vmatpush1.msra.mxu0 %v214
        %227 = vmatprep.subr.mxu0 0.0
        %228 = vmatpush1.msra.mxu0 0.0
        %229 = vmatprep.subr.mxu0 0.0
        %230 = vmatpush1.msra.mxu0 0.0
        %231 = vmatprep.subr.mxu0 0.0
        %232 = vmatpush1.msra.mxu0 0.0
        %233 = vmatprep.subr.mxu0 0.0
        %234 = vmatpush1.msra.mxu0 0.0
        %235 = vmatprep.subr.mxu0 0.0
        %236 = vmatpush1.msra.mxu0 0.0
        %237 = vmatprep.subr.mxu0 0.0
        %238 = vmatpush1.msra.mxu0 0.0
        %239 = vmatprep.subr.mxu0 0.0
        %240 = vmatpush1.msra.mxu0 0.0
        %241 = vmatprep.subr.mxu0 0.0
        %242 = vmatpush1.msra.mxu0 0.0
        %243 = vmatprep.subr.mxu0 0.0
        %244 = vmatpush1.msra.mxu0 0.0
        %245 = vmatprep.subr.mxu0 0.0
        %246 = vmatpush1.msra.mxu0 0.0
        %247 = vmatprep.subr.mxu0 0.0
        %248 = vmatpush1.msra.mxu0 0.0
        %249 = vmatprep.subr.mxu0 0.0
        %250 = vmatpush1.msra.mxu0 0.0
        %251 = vmatprep.subr.mxu0 0.0
        %252 = vmatpush1.msra.mxu0 0.0
        %253 = vmatprep.subr.mxu0 0.0
        %254 = vmatpush1.msra.mxu0 0.0
        %255 = vmatprep.subr.mxu0 0.0
        %256 = vmatpush1.msra.mxu0 0.0
        %257 = vmatprep.subr.mxu0 0.0
        %258 = vmatpush1.msra.mxu0 0.0
        %259 = vmatprep.subr.mxu0 0.0
        %260 = vmatpush1.msra.mxu0 0.0
        %261 = vmatprep.subr.mxu0 0.0
        %262 = vmatpush1.msra.mxu0 0.0
        %263 = vmatprep.subr.mxu0 0.0
        %264 = vmatpush1.msra.mxu0 0.0
        %265 = vmatprep.subr.mxu0 0.0
        %266 = vmatpush1.msra.mxu0 0.0
        %267 = vmatprep.subr.mxu0 0.0
        %268 = vmatpush1.msra.mxu0 0.0
        %269 = vmatprep.subr.mxu0 0.0
        %270 = vmatpush1.msra.mxu0 0.0
        %271 = vmatprep.subr.mxu0 0.0
        %272 = vmatpush1.msra.mxu0 0.0
        %273 = vmatprep.subr.mxu0 0.0
        %274 = vmatpush1.msra.mxu0 0.0
        %275 = vmatprep.subr.mxu0 0.0
        %276 = vmatpush1.msra.mxu0 0.0
        %277 = vmatprep.subr.mxu0 0.0
        %278 = vmatpush1.msra.mxu0 0.0
        %279 = vmatprep.subr.mxu0 0.0
        %280 = vmatpush1.msra.mxu0 0.0
        %281 = vmatprep.subr.mxu0 0.0
        %282 = vmatpush1.msra.mxu0 0.0
        %283 = vmatprep.mubr.f32.mxu0 0.0
        %284 = vmatmul.mubr.f32.gmra.mrb[0].mxu0 %v217
        %v285 = vpop.f32.mrb[0].mxu0
        %v286 = vadd.f32 0.0, %v285
        %v287 = vpop.f32.mrb[0].mxu0
        %288 = vdwg.mxu0
        %v289 = vtanh.pop %v286
        %v290 = vld [vmem:[%s3] sm:$0xff]
        %v291 = vld [vmem:[%s3 + $0x8] sm:$0xff]
        %v292 = vld [vmem:[%s3 + $0x10] sm:$0xff]
        %v293 = vld [vmem:[%s3 + $0x18] sm:$0xff]
        %v294 = vld [vmem:[%s3 + $0x20] sm:$0xff]
        %v295 = vld [vmem:[%s3 + $0x28] sm:$0xff]
        %v296 = vld [vmem:[%s3 + $0x30] sm:$0xff]
        %v297 = vld [vmem:[%s3 + $0x38] sm:$0xff]
        %v298 = vld [vmem:[%s3 + $0x40] sm:$0xff]
        %v299 = vld [vmem:[%s3 + $0x48] sm:$0xff]
        %v300 = vld [vmem:[%s3 + $0x50] sm:$0xff]
        %v301 = vld [vmem:[%s3 + $0x58] sm:$0xff]
        %v302 = vld [vmem:[%s3 + $0x60] sm:$0xff]
        %v303 = vld [vmem:[%s3 + $0x68] sm:$0xff]
        %v304 = vld [vmem:[%s3 + $0x70] sm:$0xff]
        %v305 = vld [vmem:[%s3 + $0x78] sm:$0xff]
        %306 = vmatprep.subr.mxu0 0.0
        %307 = vmatpush1.msra.mxu0 %v290
        %308 = vmatprep.subr.mxu0 0.0
        %309 = vmatpush1.msra.mxu0 %v291
        %310 = vmatprep.subr.mxu0 0.0
        %311 = vmatpush1.msra.mxu0 %v292
        %312 = vmatprep.subr.mxu0 0.0
        %313 = vmatpush1.msra.mxu0 %v293
        %314 = vmatprep.subr.mxu0 0.0
        %315 = vmatpush1.msra.mxu0 %v294
        %316 = vmatprep.subr.mxu0 0.0
        %317 = vmatpush1.msra.mxu0 %v295
        %318 = vmatprep.subr.mxu0 0.0
        %319 = vmatpush1.msra.mxu0 %v296
        %320 = vmatprep.subr.mxu0 0.0
        %321 = vmatpush1.msra.mxu0 %v297
        %322 = vmatprep.subr.mxu0 0.0
        %323 = vmatpush1.msra.mxu0 %v298
        %324 = vmatprep.subr.mxu0 0.0
        %325 = vmatpush1.msra.mxu0 %v299
        %326 = vmatprep.subr.mxu0 0.0
        %327 = vmatpush1.msra.mxu0 %v300
        %328 = vmatprep.subr.mxu0 0.0
        %329 = vmatpush1.msra.mxu0 %v301
        %330 = vmatprep.subr.mxu0 0.0
        %331 = vmatpush1.msra.mxu0 %v302
        %332 = vmatprep.subr.mxu0 0.0
        %333 = vmatpush1.msra.mxu0 %v303
        %334 = vmatprep.subr.mxu0 0.0
        %335 = vmatpush1.msra.mxu0 %v304
        %336 = vmatprep.subr.mxu0 0.0
        %337 = vmatpush1.msra.mxu0 %v305
        %338 = vmatprep.subr.mxu0 0.0
        %339 = vmatpush1.msra.mxu0 0.0
        %340 = vmatprep.subr.mxu0 0.0
        %341 = vmatpush1.msra.mxu0 0.0
        %342 = vmatprep.subr.mxu0 0.0
        %343 = vmatpush1.msra.mxu0 0.0
        %344 = vmatprep.subr.mxu0 0.0
        %345 = vmatpush1.msra.mxu0 0.0
        %346 = vmatprep.subr.mxu0 0.0
        %347 = vmatpush1.msra.mxu0 0.0
        %348 = vmatprep.subr.mxu0 0.0
        %349 = vmatpush1.msra.mxu0 0.0
        %350 = vmatprep.subr.mxu0 0.0
        %351 = vmatpush1.msra.mxu0 0.0
        %352 = vmatprep.subr.mxu0 0.0
        %353 = vmatpush1.msra.mxu0 0.0
        %354 = vmatprep.subr.mxu0 0.0
        %355 = vmatpush1.msra.mxu0 0.0
        %356 = vmatprep.subr.mxu0 0.0
        %357 = vmatpush1.msra.mxu0 0.0
        %358 = vmatprep.subr.mxu0 0.0
        %359 = vmatpush1.msra.mxu0 0.0
        %360 = vmatprep.subr.mxu0 0.0
        %361 = vmatpush1.msra.mxu0 0.0
        %362 = vmatprep.subr.mxu0 0.0
        %363 = vmatpush1.msra.mxu0 0.0
        %364 = vmatprep.subr.mxu0 0.0
        %365 = vmatpush1.msra.mxu0 0.0
        %366 = vmatprep.subr.mxu0 0.0
        %367 = vmatpush1.msra.mxu0 0.0
        %368 = vmatprep.subr.mxu0 0.0
        %369 = vmatpush1.msra.mxu0 0.0
        %370 = vmatprep.mubr.f32.mxu0 0.0
        %371 = vmatmul.mubr.f32.gmra.mrb[0].mxu0 %v289
        %v372 = vpop.f32.mrb[0].mxu0
        %v373 = vadd.f32 0.0, %v372
        %v374 = vpop.f32.mrb[0].mxu0
        %375 = vdwg.mxu0
        %v376 = vld [vmem:[%s209] sm:$0xff]
        %378 = vset.pattern.permute.xlu0 0
        %379 = vperm.xlu0 %378, %v376
        %v380 = vpop.permute.xlu0 %379
        %v382 = vadd.f32 %v373, %v380
        %vm383 = vcmask 31744
        %v384 = vsel %vm383, %v382, -inf
        %v385 = vrot.slane %v384, 4
        %v386 = vmax.f32 %v384, %v385
        %v387 = vrot.slane %v386, 2
        %v388 = vmax.f32 %v386, %v387
        %v389 = vrot.slane %v388, 1
        %v390 = vmax.f32 %v388, %v389
        %v391 = vsub.f32 %v382, %v390
        %v392 = vmul.f32 %v391, 1.442695
        %v393 = vpow.pop %v392
        %v394 = vsel %vm383, %v393, 0.0
        %v395 = vrot.slane %v394, 4
        %v396 = vadd.f32 %v394, %v395
        %v397 = vrot.slane %v396, 2
        %v398 = vadd.f32 %v396, %v397
        %v399 = vrot.slane %v398, 1
        %v400 = vadd.f32 %v398, %v399
        %v401 = vrcp.pop %v400
        %v402 = vmul.f32 %v393, %v401
        %404 = vset.pattern.permute.xlu0 0
        %405 = vperm.xlu0 %404, %v402
        %v406 = vpop.permute.xlu0 %405
        %v408 = vmul.f32 %v406, %v210
        %v409 = vsel %vm215, %v408, 0.0
        %v410 = vrot.slane %v409, 4
        %v411 = vadd.f32 %v409, %v410
        %v412 = vrot.slane %v411, 2
        %v413 = vadd.f32 %v411, %v412
        %v414 = vrot.slane %v413, 1
        %v415 = vadd.f32 %v413, %v414
        %vm416 = vcmask 253952
        %417 = vst.msk [vmem:[%s201] sm:$0x1] %vm416, %v415
        %418 = vset.pattern.permute.xlu0 1
        %419 = vperm.xlu0 %418, %v402
        %v420 = vpop.permute.xlu0 %419
        %v422 = vmul.f32 %v420, %v210
        %v423 = vsel %vm215, %v422, 0.0
        %v424 = vrot.slane %v423, 4
        %v425 = vadd.f32 %v423, %v424
        %v426 = vrot.slane %v425, 2
        %v427 = vadd.f32 %v425, %v426
        %v428 = vrot.slane %v427, 1
        %v429 = vadd.f32 %v427, %v428
        %430 = vst.msk [vmem:[%s201 + $0x1] sm:$0x1] %vm416, %v429
        %431 = vset.pattern.permute.xlu0 2
        %432 = vperm.xlu0 %431, %v402
        %v433 = vpop.permute.xlu0 %432
        %v435 = vmul.f32 %v433, %v210
        %v436 = vsel %vm215, %v435, 0.0
        %v437 = vrot.slane %v436, 4
        %v438 = vadd.f32 %v436, %v437
        %v439 = vrot.slane %v438, 2
        %v440 = vadd.f32 %v438, %v439
        %v441 = vrot.slane %v440, 1
        %v442 = vadd.f32 %v440, %v441
        %443 = vst.msk [vmem:[%s201 + $0x2] sm:$0x1] %vm416, %v442
        %444 = vset.pattern.permute.xlu0 3
        %445 = vperm.xlu0 %444, %v402
        %v446 = vpop.permute.xlu0 %445
        %v448 = vmul.f32 %v446, %v210
        %v449 = vsel %vm215, %v448, 0.0
        %v450 = vrot.slane %v449, 4
        %v451 = vadd.f32 %v449, %v450
        %v452 = vrot.slane %v451, 2
        %v453 = vadd.f32 %v451, %v452
        %v454 = vrot.slane %v453, 1
        %v455 = vadd.f32 %v453, %v454
        %456 = vst.msk [vmem:[%s201 + $0x3] sm:$0x1] %vm416, %v455
        %s457 = sand.u32 %s120, 1
        %s458 = scalar_lea.sflag [#allocation3], %s457
        %s459 = sand.u32 %s120, 1
        %s460 = smul.addr %s459, 4
        %s461 = scalar_lea.vmem [#allocation2], %s460
        // Predicated region
        $region37: #{tpu_custom_call.1} parent=35 // pred_check
          %p462 = pneg %p130
        $region38: #{tpu_custom_call.1} parent=35 // pred_check_branch
          %464 = sbr.rel (%p462) target = $region40
        $region39: #{tpu_custom_call.1} parent=35 // pred_region
          %s466 = ssub.s32 64, 64
          %467 = vsyncadd %s458, %s466
          %s468 = smul.addr %s18, 64
          %s469 = scalar_lea.hbm %s4, %s468
          %s471 = sshll.u32 %s461, 4
          %s472 = int_to_ptr.vmem [resolvable:$true] %s471
          %474 = dma.vmem_to_hbm [thread:$0]  %s472, 64, %s469, %s458
        $region40: #{tpu_custom_call.1} parent=35 // pred_fallthru
          _
      $region36: #{tpu_custom_call.1} parent=5 // pred_fallthru
        _
      %p475 = scmp.le.s32.totalorder 2, %s13
      // Predicated region
      $region41: #{tpu_custom_call.1} parent=5 // pred_check
        %p476 = pneg %p475
      $region42: #{tpu_custom_call.1} parent=5 // pred_check_branch
        %478 = sbr.rel (%p476) target = $region44
      $region43: #{tpu_custom_call.1} parent=5 // pred_region
        %s479 = ssub.s32 %s13, 2
        // Predicated region
        $region45: #{tpu_custom_call.1} parent=43 // pred_check
          %p480 = pneg %p136
        $region46: #{tpu_custom_call.1} parent=43 // pred_check_branch
          %482 = sbr.rel (%p480) target = $region48
        $region47: #{tpu_custom_call.1} parent=43 // pred_region
          %s483 = sand.u32 %s121, 1
          %s484 = scalar_lea.sflag [#allocation3], %s483
          %s485 = sand.u32 %s121, 1
          %s486 = smul.addr %s485, 4
          %s487 = scalar_lea.vmem [#allocation2], %s486
          %488 = dma.done %s484, 64
        $region48: #{tpu_custom_call.1} parent=43 // pred_fallthru
          _
      $region44: #{tpu_custom_call.1} parent=5 // pred_fallthru
        _
    $region6: #{tpu_custom_call.1} parent=1 // loop_footer
      %s17 = sadd.s32 1, %s13
    $region7: #{tpu_custom_call.1} parent=1 // loop_footer_branch
      %12 = sbr.rel target = $region3
    $region8: #{tpu_custom_call.1} parent=1 // loop_exit
      _
    %489 = vsyncpa [#allocation3], 1
    %s490 = scalar_lea.sflag [#allocation3], 1
    %491 = vsyncpa %s490, 1

</llo_original>
